<compile_context>
chip_gen: v6e
topology: v6e:2x2x1
jax: 0.10.0
libtpu: 0.0.40
codegen_flags: <defaults>
</compile_context>

<pallas_src>
import jax
import jax.numpy as jnp
from jax.experimental import pallas as pl
from jax.experimental.pallas import tpu as pltpu

LN_EPS = 1e-5


def _round_up(x, m):
    return (x + m - 1) // m * m


def _layernorm(x, gamma, beta):
    # Two-pass form (matches torch / reference; avoids E[x^2]-mu^2 cancellation).
    mu = jnp.mean(x, axis=-1, keepdims=True)
    var = jnp.mean((x - mu) ** 2, axis=-1, keepdims=True)
    return (x - mu) * jax.lax.rsqrt(var + LN_EPS) * gamma + beta


def state_predictor_kernel(
    state_ref, action_ref,
    w1s_ref, w1a_ref, v1_ref,     # v1 = [b1; gamma1; beta1]  (3, hidden)
    w2_ref, v2_ref,               # v2 = [b2; gamma2; beta2]  (3, half)
    w3_ref, b3_ref,
    out_ref,
):
    s = state_ref[...].astype(jnp.float32)    # state.float() in torch
    a = action_ref[...].astype(jnp.float32)

    # fc1 (concat folded into two MXU pushes) -> ReLU -> LayerNorm(hidden)
    h1 = (jnp.dot(s, w1s_ref[...], preferred_element_type=jnp.float32)
          + jnp.dot(a, w1a_ref[...], preferred_element_type=jnp.float32)
          + v1_ref[0:1, :])
    h1 = jnp.maximum(h1, 0.0)
    h1 = _layernorm(h1, v1_ref[1:2, :], v1_ref[2:3, :])

    # fc2 -> ReLU -> LayerNorm(hidden // 2)
    h2 = jnp.dot(h1, w2_ref[...], preferred_element_type=jnp.float32) + v2_ref[0:1, :]
    h2 = jnp.maximum(h2, 0.0)
    h2 = _layernorm(h2, v2_ref[1:2, :], v2_ref[2:3, :])

    # Dropout(p=0.05): identity in eval mode.
    # TODO(synk): training-mode dropout (pltpu.prng_random_bits mask) not emitted.

    # fc3 + residual, stored at the true (unpadded) state_dim width.
    y = jnp.dot(h2, w3_ref[...], preferred_element_type=jnp.float32) + b3_ref[...]
    out_ref[...] = y + s


def state_predictor(state, action, kparams, *, block_b=2048):
    """state: (B, state_dim), action: (B, action_dim). Returns (B, state_dim) f32."""
    B, state_dim = state.shape
    _, action_dim = action.shape
    hidden = kparams["w1s"].shape[1]
    half = kparams["w2"].shape[1]

    # Batch tile: multiple of 8 (sublane). For B >= 16 make the grid have at
    # least 2 steps so the "parallel" axis actually spans v7x's 2 TensorCores;
    # cap at block_b to amortize per-step overhead without blowing VMEM.
    TB = min(block_b, max(8, _round_up(pl.cdiv(B, 2), 8)))
    grid = (pl.cdiv(B, TB),)   # ragged last block is fine: all ops are row-wise,
                               # padded rows are never written back.

    weights = (kparams["w1s"], kparams["w1a"], kparams["v1"],
               kparams["w2"], kparams["v2"], kparams["w3"], kparams["b3"])

    # VMEM budget: double-buffered I/O tiles + f32 temporaries + resident weights.
    per_row = 2 * (state_dim + action_dim + state_dim) + 2 * hidden + half + state_dim
    est = 4 * TB * per_row + 4 * sum(int(w.size) for w in weights)
    vmem_limit = int(min(max(2 * est, 16 << 20), 48 << 20))

    def batch_spec(feat):
        return pl.BlockSpec((TB, feat), lambda i: (i, 0))

    def resident(arr):
        # Same block index every step -> stays VMEM-resident, no re-DMA.
        return pl.BlockSpec(arr.shape, lambda i: (0, 0))

    in_specs = [batch_spec(state_dim), batch_spec(action_dim)]
    in_specs += [resident(w) for w in weights]

    out = pl.pallas_call(
        state_predictor_kernel,
        out_shape=jax.ShapeDtypeStruct((B, state_dim), jnp.float32),
        grid=grid,
        in_specs=in_specs,
        out_specs=pl.BlockSpec((TB, state_dim), lambda i: (i, 0)),
        compiler_params=pltpu.CompilerParams(
            dimension_semantics=("parallel",),   # megacore split on v7x
            vmem_limit_bytes=vmem_limit,
        ),
    )(state, action, *weights)

    return out


# ----------------------------- parameters ---------------------------------

def init_raw_params(key, state_dim, action_dim, hidden_dim=128):
    """Torch-like parameter shapes (Linear weights stored as (in, out))."""
    in_dim = state_dim + action_dim
    half = hidden_dim // 2
    k1, k2, k3, k4, k5, k6 = jax.random.split(key, 6)

    def uinit(k, shape, fan_in):
        bound = 1.0 / jnp.sqrt(fan_in)
        return jax.random.uniform(k, shape, jnp.float32, -bound, bound)

    return {
        "w1": uinit(k1, (in_dim, hidden_dim), in_dim),
        "b1": uinit(k2, (hidden_dim,), in_dim),
        "g1": jnp.ones((hidden_dim,), jnp.float32),
        "bt1": jnp.zeros((hidden_dim,), jnp.float32),
        "w2": uinit(k3, (hidden_dim, half), hidden_dim),
        "b2": uinit(k4, (half,), hidden_dim),
        "g2": jnp.ones((half,), jnp.float32),
        "bt2": jnp.zeros((half,), jnp.float32),
        "w3": uinit(k5, (half, state_dim), half),
        "b3": uinit(k6, (state_dim,), half),
    }


def pack_params(raw, state_dim):
    """Repack raw params for the kernel: split fc1 at the state/action boundary,
    pack each layer's (bias, gamma, beta) into one (3, N) array."""
    return {
        "w1s": raw["w1"][:state_dim],
        "w1a": raw["w1"][state_dim:],
        "v1": jnp.stack([raw["b1"], raw["g1"], raw["bt1"]]),
        "w2": raw["w2"],
        "v2": jnp.stack([raw["b2"], raw["g2"], raw["bt2"]]),
        "w3": raw["w3"],
        "b3": raw["b3"].reshape(1, -1),
    }


# ----------------------------- reference ----------------------------------

def _layernorm_ref(x, gamma, beta):
    mu = jnp.mean(x, axis=-1, keepdims=True)
    var = jnp.mean((x - mu) ** 2, axis=-1, keepdims=True)
    return (x - mu) * jax.lax.rsqrt(var + LN_EPS) * gamma + beta


def _reference(state, action, p):
    x = jnp.concatenate([state, action], axis=1)
    h1 = jnp.maximum(x @ p["w1"] + p["b1"], 0.0)
    h1 = _layernorm_ref(h1, p["g1"], p["bt1"])
    h2 = jnp.maximum(h1 @ p["w2"] + p["b2"], 0.0)
    h2 = _layernorm_ref(h2, p["g2"], p["bt2"])
    return state + (h2 @ p["w3"] + p["b3"])


if __name__ == "__main__":
    state_dim, action_dim, hidden_dim = 16, 8, 32

    key = jax.random.PRNGKey(0)
    k_s, k_a, k_p = jax.random.split(key, 3)
    raw = init_raw_params(k_p, state_dim, action_dim, hidden_dim)
    kparams = pack_params(raw, state_dim)

    # Case 1: aligned batch (single grid step).
    batch = 8
    state = jax.random.normal(k_s, (batch, state_dim), jnp.float32)
    action = jax.random.normal(k_a, (batch, action_dim), jnp.float32)
    out = jax.block_until_ready(state_predictor(state, action, kparams))
    ref = _reference(state, action, raw)
    assert out.shape == (batch, state_dim)
    assert jnp.allclose(out, ref, atol=1e-4, rtol=1e-4), "mismatch vs JAX reference"

    # Case 2: batch not a multiple of the tile (exercises the ragged last block).
    batch2 = 10
    state2 = jax.random.normal(jax.random.PRNGKey(1), (batch2, state_dim), jnp.float32)
    action2 = jax.random.normal(jax.random.PRNGKey(2), (batch2, action_dim), jnp.float32)
    out2 = jax.block_until_ready(state_predictor(state2, action2, kparams))
    ref2 = _reference(state2, action2, raw)
    assert out2.shape == (batch2, state_dim)
    assert jnp.allclose(out2, ref2, atol=1e-4, rtol=1e-4), "mismatch vs JAX reference (ragged batch)"

    print("KERNEL_OK")
</pallas_src>

<mosaic_0001>
module attributes {stable_mosaic.version = 11 : i64} {
  func.func @state_predictor_kernel(%arg0: i32, %arg1: memref<8x16xf32, #tpu.memory_space<vmem>>, %arg2: memref<8x8xf32, #tpu.memory_space<vmem>>, %arg3: memref<16x32xf32, #tpu.memory_space<vmem>>, %arg4: memref<8x32xf32, #tpu.memory_space<vmem>>, %arg5: memref<3x32xf32, #tpu.memory_space<vmem>>, %arg6: memref<32x16xf32, #tpu.memory_space<vmem>>, %arg7: memref<3x16xf32, #tpu.memory_space<vmem>>, %arg8: memref<16x16xf32, #tpu.memory_space<vmem>>, %arg9: memref<1x16xf32, #tpu.memory_space<vmem>>, %arg10: memref<8x16xf32, #tpu.memory_space<vmem>>) attributes {dimension_semantics = [#tpu.dimension_semantics<parallel>], iteration_bounds = array<i64: 1>, scalar_prefetch = 0 : i64, scratch_operands = 0 : i64, tpu.core_type = #tpu.core_type<tc>, window_params = [{transform_indices = @transform_0, window_bounds = array<i64: 8, 16>}, {transform_indices = @transform_1, window_bounds = array<i64: 8, 8>}, {pipeline_mode = #tpu.pipeline_mode<synchronous>, transform_indices = @transform_2, window_bounds = array<i64: 16, 32>}, {pipeline_mode = #tpu.pipeline_mode<synchronous>, transform_indices = @transform_3, window_bounds = array<i64: 8, 32>}, {pipeline_mode = #tpu.pipeline_mode<synchronous>, transform_indices = @transform_4, window_bounds = array<i64: 3, 32>}, {pipeline_mode = #tpu.pipeline_mode<synchronous>, transform_indices = @transform_5, window_bounds = array<i64: 32, 16>}, {pipeline_mode = #tpu.pipeline_mode<synchronous>, transform_indices = @transform_6, window_bounds = array<i64: 3, 16>}, {pipeline_mode = #tpu.pipeline_mode<synchronous>, transform_indices = @transform_7, window_bounds = array<i64: 16, 16>}, {pipeline_mode = #tpu.pipeline_mode<synchronous>, transform_indices = @transform_8, window_bounds = array<i64: 1, 16>}, {transform_indices = @transform_9, window_bounds = array<i64: 8, 16>}]} {
    %c0 = arith.constant 0 : index
    %c0_0 = arith.constant 0 : index
    %0 = vector.load %arg1[%c0, %c0_0] : memref<8x16xf32, #tpu.memory_space<vmem>>, vector<8x16xf32>
    %c0_1 = arith.constant 0 : index
    %c0_2 = arith.constant 0 : index
    %1 = vector.load %arg2[%c0_1, %c0_2] : memref<8x8xf32, #tpu.memory_space<vmem>>, vector<8x8xf32>
    %c0_3 = arith.constant 0 : index
    %c0_4 = arith.constant 0 : index
    %2 = vector.load %arg3[%c0_3, %c0_4] : memref<16x32xf32, #tpu.memory_space<vmem>>, vector<16x32xf32>
    %cst = arith.constant dense<0.000000e+00> : vector<8x32xf32>
    %3 = tpu.matmul %0, %2, %cst {dimension_numbers = #tpu.dot_dimension_numbers<[1], [0], [0], [1], [0, 0, 1, 1], [], []>} : vector<8x16xf32>, vector<16x32xf32>, vector<8x32xf32> -> vector<8x32xf32>
    %c0_5 = arith.constant 0 : index
    %c0_6 = arith.constant 0 : index
    %4 = vector.load %arg4[%c0_5, %c0_6] : memref<8x32xf32, #tpu.memory_space<vmem>>, vector<8x32xf32>
    %cst_7 = arith.constant dense<0.000000e+00> : vector<8x32xf32>
    %5 = tpu.matmul %1, %4, %cst_7 {dimension_numbers = #tpu.dot_dimension_numbers<[1], [0], [0], [1], [0, 0, 1, 1], [], []>} : vector<8x8xf32>, vector<8x32xf32>, vector<8x32xf32> -> vector<8x32xf32>
    %6 = arith.addf %3, %5 : vector<8x32xf32>
    %c0_8 = arith.constant 0 : index
    %c0_9 = arith.constant 0 : index
    %7 = vector.load %arg5[%c0_8, %c0_9] : memref<3x32xf32, #tpu.memory_space<vmem>>, vector<1x32xf32>
    %8 = vector.broadcast %7 : vector<1x32xf32> to vector<8x32xf32>
    %9 = arith.addf %6, %8 : vector<8x32xf32>
    %cst_10 = arith.constant 0.000000e+00 : f32
    %10 = vector.broadcast %cst_10 : f32 to vector<8x32xf32>
    %11 = arith.maximumf %9, %10 : vector<8x32xf32>
    %c1 = arith.constant 1 : index
    %c0_11 = arith.constant 0 : index
    %12 = vector.load %arg5[%c1, %c0_11] : memref<3x32xf32, #tpu.memory_space<vmem>>, vector<1x32xf32>
    %c2 = arith.constant 2 : index
    %c0_12 = arith.constant 0 : index
    %13 = vector.load %arg5[%c2, %c0_12] : memref<3x32xf32, #tpu.memory_space<vmem>>, vector<1x32xf32>
    %cst_13 = arith.constant dense<0.000000e+00> : vector<8xf32>
    %14 = vector.multi_reduction <add>, %11, %cst_13 [1] : vector<8x32xf32> to vector<8xf32>
    %15 = vector.shape_cast %14 : vector<8xf32> to vector<8x1xf32>
    %cst_14 = arith.constant 3.200000e+01 : f32
    %16 = vector.broadcast %cst_14 : f32 to vector<8x1xf32>
    %17 = arith.divf %15, %16 : vector<8x1xf32>
    %18 = vector.broadcast %17 : vector<8x1xf32> to vector<8x32xf32>
    %19 = arith.subf %11, %18 : vector<8x32xf32>
    %20 = arith.mulf %19, %19 : vector<8x32xf32>
    %cst_15 = arith.constant dense<0.000000e+00> : vector<8xf32>
    %21 = vector.multi_reduction <add>, %20, %cst_15 [1] : vector<8x32xf32> to vector<8xf32>
    %22 = vector.shape_cast %21 : vector<8xf32> to vector<8x1xf32>
    %cst_16 = arith.constant 3.200000e+01 : f32
    %23 = vector.broadcast %cst_16 : f32 to vector<8x1xf32>
    %24 = arith.divf %22, %23 : vector<8x1xf32>
    %25 = vector.broadcast %17 : vector<8x1xf32> to vector<8x32xf32>
    %26 = arith.subf %11, %25 : vector<8x32xf32>
    %cst_17 = arith.constant 9.99999974E-6 : f32
    %27 = vector.broadcast %cst_17 : f32 to vector<8x1xf32>
    %28 = arith.addf %24, %27 : vector<8x1xf32>
    %29 = math.rsqrt %28 : vector<8x1xf32>
    %30 = vector.broadcast %29 : vector<8x1xf32> to vector<8x32xf32>
    %31 = arith.mulf %26, %30 : vector<8x32xf32>
    %32 = vector.broadcast %12 : vector<1x32xf32> to vector<8x32xf32>
    %33 = arith.mulf %31, %32 : vector<8x32xf32>
    %34 = vector.broadcast %13 : vector<1x32xf32> to vector<8x32xf32>
    %35 = arith.addf %33, %34 : vector<8x32xf32>
    %c0_18 = arith.constant 0 : index
    %c0_19 = arith.constant 0 : index
    %36 = vector.load %arg6[%c0_18, %c0_19] : memref<32x16xf32, #tpu.memory_space<vmem>>, vector<32x16xf32>
    %cst_20 = arith.constant dense<0.000000e+00> : vector<8x16xf32>
    %37 = tpu.matmul %35, %36, %cst_20 {dimension_numbers = #tpu.dot_dimension_numbers<[1], [0], [0], [1], [0, 0, 1, 1], [], []>} : vector<8x32xf32>, vector<32x16xf32>, vector<8x16xf32> -> vector<8x16xf32>
    %c0_21 = arith.constant 0 : index
    %c0_22 = arith.constant 0 : index
    %38 = vector.load %arg7[%c0_21, %c0_22] : memref<3x16xf32, #tpu.memory_space<vmem>>, vector<1x16xf32>
    %39 = vector.broadcast %38 : vector<1x16xf32> to vector<8x16xf32>
    %40 = arith.addf %37, %39 : vector<8x16xf32>
    %cst_23 = arith.constant 0.000000e+00 : f32
    %41 = vector.broadcast %cst_23 : f32 to vector<8x16xf32>
    %42 = arith.maximumf %40, %41 : vector<8x16xf32>
    %c1_24 = arith.constant 1 : index
    %c0_25 = arith.constant 0 : index
    %43 = vector.load %arg7[%c1_24, %c0_25] : memref<3x16xf32, #tpu.memory_space<vmem>>, vector<1x16xf32>
    %c2_26 = arith.constant 2 : index
    %c0_27 = arith.constant 0 : index
    %44 = vector.load %arg7[%c2_26, %c0_27] : memref<3x16xf32, #tpu.memory_space<vmem>>, vector<1x16xf32>
    %cst_28 = arith.constant dense<0.000000e+00> : vector<8xf32>
    %45 = vector.multi_reduction <add>, %42, %cst_28 [1] : vector<8x16xf32> to vector<8xf32>
    %46 = vector.shape_cast %45 : vector<8xf32> to vector<8x1xf32>
    %cst_29 = arith.constant 1.600000e+01 : f32
    %47 = vector.broadcast %cst_29 : f32 to vector<8x1xf32>
    %48 = arith.divf %46, %47 : vector<8x1xf32>
    %49 = vector.broadcast %48 : vector<8x1xf32> to vector<8x16xf32>
    %50 = arith.subf %42, %49 : vector<8x16xf32>
    %51 = arith.mulf %50, %50 : vector<8x16xf32>
    %cst_30 = arith.constant dense<0.000000e+00> : vector<8xf32>
    %52 = vector.multi_reduction <add>, %51, %cst_30 [1] : vector<8x16xf32> to vector<8xf32>
    %53 = vector.shape_cast %52 : vector<8xf32> to vector<8x1xf32>
    %cst_31 = arith.constant 1.600000e+01 : f32
    %54 = vector.broadcast %cst_31 : f32 to vector<8x1xf32>
    %55 = arith.divf %53, %54 : vector<8x1xf32>
    %56 = vector.broadcast %48 : vector<8x1xf32> to vector<8x16xf32>
    %57 = arith.subf %42, %56 : vector<8x16xf32>
    %cst_32 = arith.constant 9.99999974E-6 : f32
    %58 = vector.broadcast %cst_32 : f32 to vector<8x1xf32>
    %59 = arith.addf %55, %58 : vector<8x1xf32>
    %60 = math.rsqrt %59 : vector<8x1xf32>
    %61 = vector.broadcast %60 : vector<8x1xf32> to vector<8x16xf32>
    %62 = arith.mulf %57, %61 : vector<8x16xf32>
    %63 = vector.broadcast %43 : vector<1x16xf32> to vector<8x16xf32>
    %64 = arith.mulf %62, %63 : vector<8x16xf32>
    %65 = vector.broadcast %44 : vector<1x16xf32> to vector<8x16xf32>
    %66 = arith.addf %64, %65 : vector<8x16xf32>
    %c0_33 = arith.constant 0 : index
    %c0_34 = arith.constant 0 : index
    %67 = vector.load %arg8[%c0_33, %c0_34] : memref<16x16xf32, #tpu.memory_space<vmem>>, vector<16x16xf32>
    %cst_35 = arith.constant dense<0.000000e+00> : vector<8x16xf32>
    %68 = tpu.matmul %66, %67, %cst_35 {dimension_numbers = #tpu.dot_dimension_numbers<[1], [0], [0], [1], [0, 0, 1, 1], [], []>} : vector<8x16xf32>, vector<16x16xf32>, vector<8x16xf32> -> vector<8x16xf32>
    %c0_36 = arith.constant 0 : index
    %c0_37 = arith.constant 0 : index
    %69 = vector.load %arg9[%c0_36, %c0_37] : memref<1x16xf32, #tpu.memory_space<vmem>>, vector<1x16xf32>
    %70 = vector.broadcast %69 : vector<1x16xf32> to vector<8x16xf32>
    %71 = arith.addf %68, %70 : vector<8x16xf32>
    %72 = arith.addf %71, %0 : vector<8x16xf32>
    %c0_38 = arith.constant 0 : index
    %c0_39 = arith.constant 0 : index
    %73 = vector.load %arg10[%c0_38, %c0_39] : memref<8x16xf32, #tpu.memory_space<vmem>>, vector<8x16xf32>
    tpu.vector_store %arg10[%c0_38, %c0_39], %72 {strides = array<i32>} : memref<8x16xf32, #tpu.memory_space<vmem>>, vector<8x16xf32>,
    return
  }
  func.func @transform_0(%arg0: i32) -> (i32, i32) {
    %c0_i32 = arith.constant 0 : i32
    %c0_i32_0 = arith.constant 0 : i32
    return %arg0, %c0_i32 : i32, i32
  }
  func.func @transform_1(%arg0: i32) -> (i32, i32) {
    %c0_i32 = arith.constant 0 : i32
    %c0_i32_0 = arith.constant 0 : i32
    return %arg0, %c0_i32 : i32, i32
  }
  func.func @transform_2(%arg0: i32) -> (i32, i32) {
    %c0_i32 = arith.constant 0 : i32
    %c0_i32_0 = arith.constant 0 : i32
    %c0_i32_1 = arith.constant 0 : i32
    return %c0_i32, %c0_i32_0 : i32, i32
  }
  func.func @transform_3(%arg0: i32) -> (i32, i32) {
    %c0_i32 = arith.constant 0 : i32
    %c0_i32_0 = arith.constant 0 : i32
    %c0_i32_1 = arith.constant 0 : i32
    return %c0_i32, %c0_i32_0 : i32, i32
  }
  func.func @transform_4(%arg0: i32) -> (i32, i32) {
    %c0_i32 = arith.constant 0 : i32
    %c0_i32_0 = arith.constant 0 : i32
    %c0_i32_1 = arith.constant 0 : i32
    return %c0_i32, %c0_i32_0 : i32, i32
  }
  func.func @transform_5(%arg0: i32) -> (i32, i32) {
    %c0_i32 = arith.constant 0 : i32
    %c0_i32_0 = arith.constant 0 : i32
    %c0_i32_1 = arith.constant 0 : i32
    return %c0_i32, %c0_i32_0 : i32, i32
  }
  func.func @transform_6(%arg0: i32) -> (i32, i32) {
    %c0_i32 = arith.constant 0 : i32
    %c0_i32_0 = arith.constant 0 : i32
    %c0_i32_1 = arith.constant 0 : i32
    return %c0_i32, %c0_i32_0 : i32, i32
  }
  func.func @transform_7(%arg0: i32) -> (i32, i32) {
    %c0_i32 = arith.constant 0 : i32
    %c0_i32_0 = arith.constant 0 : i32
    %c0_i32_1 = arith.constant 0 : i32
    return %c0_i32, %c0_i32_0 : i32, i32
  }
  func.func @transform_8(%arg0: i32) -> (i32, i32) {
    %c0_i32 = arith.constant 0 : i32
    %c0_i32_0 = arith.constant 0 : i32
    %c0_i32_1 = arith.constant 0 : i32
    return %c0_i32, %c0_i32_0 : i32, i32
  }
  func.func @transform_9(%arg0: i32) -> (i32, i32) {
    %c0_i32 = arith.constant 0 : i32
    %c0_i32_0 = arith.constant 0 : i32
    return %arg0, %c0_i32 : i32, i32
  }
}

</mosaic_0001>

<llo_original>
// kernel: tpu_custom_call.1
$region0: #{tpu_custom_call.1}
  #allocation0 [shape = 'u32[]', space=smem, size = 0x4, offset = 0x4, fixed_abs, tag = 'smem constant byte address 0x4 - core index']
  #allocation1 [shape = 'u32[144,128]{1,0:T(1,128)}', space=vmem, size = 0x12000, scoped, tag = 'internal scratch']
  %s0 = inlined_call_operand.vmem [shape: f32[8,16], index: 0, kind: input, shape index: {}]
  %s1 = inlined_call_operand.vmem [shape: f32[8,8], index: 1, kind: input, shape index: {}]
  %s2 = inlined_call_operand.vmem [shape: f32[16,32], index: 2, kind: input, shape index: {}]
  %s3 = inlined_call_operand.hbm [shape: f32[8,32], index: 3, kind: input, shape index: {}]
  %s4 = inlined_call_operand.vmem [shape: f32[3,32], index: 4, kind: input, shape index: {}]
  %s5 = inlined_call_operand.vmem [shape: f32[32,16], index: 5, kind: input, shape index: {}]
  %s6 = inlined_call_operand.vmem [shape: f32[3,16], index: 6, kind: input, shape index: {}]
  %s7 = inlined_call_operand.vmem [shape: f32[16,16], index: 7, kind: input, shape index: {}]
  %s8 = inlined_call_operand.vmem [shape: f32[1,16], index: 8, kind: input, shape index: {}]
  %s9 = inlined_call_operand.hbm [shape: f32[8,16], index: 9, kind: output, shape index: {}]
  %s10 = sld [smem:[#allocation0]]
  $region50: #{tpu_custom_call.1} parent=0
    _
  %s12 = ssub.s32 1, %s10
  %s13 = scalar_select 0, %s12, %s10
  $region1: #{tpu_custom_call.1} parent=0
    #allocation2 [shape = 'u8[4096]{0}', space=vmem, size = 0x1000, scoped, tag = 'input window, operand 3, single buffered']
    #allocation3 [shape = 's32[1]{0}', space=sflag, size = 0x4, scoped, tag = 'scoped memory for tpu_custom_call.1']
    #allocation4 [shape = 's32[1]{0}', space=sflag, size = 0x4, scoped, tag = 'scoped memory for tpu_custom_call.1']
    #allocation5 [shape = 'u8[4096]{0}', space=vmem, size = 0x1000, scoped, tag = 'output window, operand 0, single buffered']
    %14 = vsyncpa [#allocation3], 0
    %15 = vsyncpa [#allocation4], 0
    // Predicated region
    $region2: #{tpu_custom_call.1} parent=1 // pred_check
      _
    $region3: #{tpu_custom_call.1} parent=1 // pred_check_branch
      %17 = sbr.rel (0) target = $region5
    $region4: #{tpu_custom_call.1} parent=1 // pred_region
      _
    $region5: #{tpu_custom_call.1} parent=1 // pred_fallthru
      _
    // Predicated region
    $region6: #{tpu_custom_call.1} parent=1 // pred_check
      _
    $region7: #{tpu_custom_call.1} parent=1 // pred_check_branch
      %19 = sbr.rel (0) target = $region9
    $region8: #{tpu_custom_call.1} parent=1 // pred_region
      _
    $region9: #{tpu_custom_call.1} parent=1 // pred_fallthru
      _
    // Predicated region
    $region10: #{tpu_custom_call.1} parent=1 // pred_check
      _
    $region11: #{tpu_custom_call.1} parent=1 // pred_check_branch
      %21 = sbr.rel (0) target = $region13
    $region12: #{tpu_custom_call.1} parent=1 // pred_region
      _
    $region13: #{tpu_custom_call.1} parent=1 // pred_fallthru
      _
    // Predicated region
    $region14: #{tpu_custom_call.1} parent=1 // pred_check
      _
    $region15: #{tpu_custom_call.1} parent=1 // pred_check_branch
      %23 = sbr.rel (0) target = $region17
    $region16: #{tpu_custom_call.1} parent=1 // pred_region
      %s25 = ssub.s32 128, 128
      %26 = vsyncadd [#allocation3], %s25
      %s28 = sshll.u32 [#allocation2], 4
      %s29 = int_to_ptr.vmem [resolvable:$true] %s28
      %31 = dma.hbm_to_vmem [thread:$0]  %s3, 128, %s29, [#allocation3]
    $region17: #{tpu_custom_call.1} parent=1 // pred_fallthru
      _
    // Predicated region
    $region18: #{tpu_custom_call.1} parent=1 // pred_check
      _
    $region19: #{tpu_custom_call.1} parent=1 // pred_check_branch
      %33 = sbr.rel (0) target = $region21
    $region20: #{tpu_custom_call.1} parent=1 // pred_region
      _
    $region21: #{tpu_custom_call.1} parent=1 // pred_fallthru
      _
    // Predicated region
    $region22: #{tpu_custom_call.1} parent=1 // pred_check
      _
    $region23: #{tpu_custom_call.1} parent=1 // pred_check_branch
      %35 = sbr.rel (0) target = $region25
    $region24: #{tpu_custom_call.1} parent=1 // pred_region
      _
    $region25: #{tpu_custom_call.1} parent=1 // pred_fallthru
      _
    // Predicated region
    $region26: #{tpu_custom_call.1} parent=1 // pred_check
      _
    $region27: #{tpu_custom_call.1} parent=1 // pred_check_branch
      %37 = sbr.rel (0) target = $region29
    $region28: #{tpu_custom_call.1} parent=1 // pred_region
      _
    $region29: #{tpu_custom_call.1} parent=1 // pred_fallthru
      _
    // Predicated region
    $region30: #{tpu_custom_call.1} parent=1 // pred_check
      _
    $region31: #{tpu_custom_call.1} parent=1 // pred_check_branch
      %39 = sbr.rel (0) target = $region33
    $region32: #{tpu_custom_call.1} parent=1 // pred_region
      _
    $region33: #{tpu_custom_call.1} parent=1 // pred_fallthru
      _
    // Predicated region
    $region34: #{tpu_custom_call.1} parent=1 // pred_check
      _
    $region35: #{tpu_custom_call.1} parent=1 // pred_check_branch
      %41 = sbr.rel (0) target = $region37
    $region36: #{tpu_custom_call.1} parent=1 // pred_region
      _
    $region37: #{tpu_custom_call.1} parent=1 // pred_fallthru
      _
    // Predicated region
    $region38: #{tpu_custom_call.1} parent=1 // pred_check
      _
    $region39: #{tpu_custom_call.1} parent=1 // pred_check_branch
      %43 = sbr.rel (0) target = $region41
    $region40: #{tpu_custom_call.1} parent=1 // pred_region
      %44 = dma.done [#allocation3], 128
    $region41: #{tpu_custom_call.1} parent=1 // pred_fallthru
      _
    %v45 = vld [vmem:[%s0] sm:$0xff]
    %v46 = vld [vmem:[%s1] sm:$0xff]
    %v47 = vld [vmem:[%s2] sm:$0xff]
    %v48 = vld [vmem:[%s2 + $0x8] sm:$0xff]
    %v49 = vld [vmem:[#allocation2] sm:$0xff]
    %vm50 = vcmask 64512
    %v52 = vsel %vm50, %v46, 0
    %54 = vmatprep.subr.mxu0 0.0
    %55 = vmatpush1.msra.mxu0 0.0
    %56 = vmatprep.subr.mxu0 0.0
    %57 = vmatpush1.msra.mxu0 0.0
    %58 = vmatprep.subr.mxu0 0.0
    %59 = vmatpush1.msra.mxu0 0.0
    %60 = vmatprep.subr.mxu0 0.0
    %61 = vmatpush1.msra.mxu0 0.0
    %62 = vmatprep.subr.mxu0 0.0
    %63 = vmatpush1.msra.mxu0 0.0
    %64 = vmatprep.subr.mxu0 0.0
    %65 = vmatpush1.msra.mxu0 0.0
    %66 = vmatprep.subr.mxu0 0.0
    %67 = vmatpush1.msra.mxu0 0.0
    %68 = vmatprep.subr.mxu0 0.0
    %69 = vmatpush1.msra.mxu0 0.0
    %70 = vmatprep.subr.mxu0 0.0
    %71 = vmatpush1.msra.mxu0 0.0
    %72 = vmatprep.subr.mxu0 0.0
    %73 = vmatpush1.msra.mxu0 0.0
    %74 = vmatprep.subr.mxu0 0.0
    %75 = vmatpush1.msra.mxu0 0.0
    %76 = vmatprep.subr.mxu0 0.0
    %77 = vmatpush1.msra.mxu0 0.0
    %78 = vmatprep.subr.mxu0 0.0
    %79 = vmatpush1.msra.mxu0 0.0
    %80 = vmatprep.subr.mxu0 0.0
    %81 = vmatpush1.msra.mxu0 0.0
    %82 = vmatprep.subr.mxu0 0.0
    %83 = vmatpush1.msra.mxu0 0.0
    %84 = vmatprep.subr.mxu0 0.0
    %85 = vmatpush1.msra.mxu0 %v49
    %86 = vmatprep.subr.mxu0 0.0
    %87 = vmatpush2.msra.mxu0 0.0
    %88 = vmatprep.subr.mxu0 0.0
    %89 = vmatpush2.msra.mxu0 0.0
    %90 = vmatprep.subr.mxu0 0.0
    %91 = vmatpush2.msra.mxu0 0.0
    %92 = vmatprep.subr.mxu0 0.0
    %93 = vmatpush2.msra.mxu0 0.0
    %94 = vmatprep.subr.mxu0 0.0
    %95 = vmatpush2.msra.mxu0 0.0
    %96 = vmatprep.subr.mxu0 0.0
    %97 = vmatpush2.msra.mxu0 0.0
    %98 = vmatprep.subr.mxu0 0.0
    %99 = vmatpush2.msra.mxu0 0.0
    %100 = vmatprep.subr.mxu0 0.0
    %101 = vmatpush2.msra.mxu0 0.0
    %102 = vmatprep.subr.mxu0 0.0
    %103 = vmatpush2.msra.mxu0 0.0
    %104 = vmatprep.subr.mxu0 0.0
    %105 = vmatpush2.msra.mxu0 0.0
    %106 = vmatprep.subr.mxu0 0.0
    %107 = vmatpush2.msra.mxu0 0.0
    %108 = vmatprep.subr.mxu0 0.0
    %109 = vmatpush2.msra.mxu0 0.0
    %110 = vmatprep.subr.mxu0 0.0
    %111 = vmatpush2.msra.mxu0 0.0
    %112 = vmatprep.subr.mxu0 0.0
    %113 = vmatpush2.msra.mxu0 0.0
    %114 = vmatprep.subr.mxu0 0.0
    %115 = vmatpush2.msra.mxu0 0.0
    %116 = vmatprep.subr.mxu0 0.0
    %117 = vmatpush2.msra.mxu0 0.0
    %118 = vmatprep.mubr.f32.mxu0 0.0
    %119 = vmatmul.mubr.f32.gmra.mxu0 %v52
    %v120 = vpop.f32.mrf.mxu0
    %v121 = vadd.f32 0.0, %v120
    %v122 = vpop.f32.mrf.mxu0
    %123 = vdwg.mxu0
    %vm124 = vcmask 130048
    %v126 = vsel %vm124, %v45, 0
    %128 = vmatprep.subr.mxu0 0.0
    %129 = vmatpush1.msra.mxu0 0.0
    %130 = vmatprep.subr.mxu0 0.0
    %131 = vmatpush1.msra.mxu0 0.0
    %132 = vmatprep.subr.mxu0 0.0
    %133 = vmatpush1.msra.mxu0 0.0
    %134 = vmatprep.subr.mxu0 0.0
    %135 = vmatpush1.msra.mxu0 0.0
    %136 = vmatprep.subr.mxu0 0.0
    %137 = vmatpush1.msra.mxu0 0.0
    %138 = vmatprep.subr.mxu0 0.0
    %139 = vmatpush1.msra.mxu0 0.0
    %140 = vmatprep.subr.mxu0 0.0
    %141 = vmatpush1.msra.mxu0 0.0
    %142 = vmatprep.subr.mxu0 0.0
    %143 = vmatpush1.msra.mxu0 0.0
    %144 = vmatprep.subr.mxu0 0.0
    %145 = vmatpush1.msra.mxu0 0.0
    %146 = vmatprep.subr.mxu0 0.0
    %147 = vmatpush1.msra.mxu0 0.0
    %148 = vmatprep.subr.mxu0 0.0
    %149 = vmatpush1.msra.mxu0 0.0
    %150 = vmatprep.subr.mxu0 0.0
    %151 = vmatpush1.msra.mxu0 0.0
    %152 = vmatprep.subr.mxu0 0.0
    %153 = vmatpush1.msra.mxu0 0.0
    %154 = vmatprep.subr.mxu0 0.0
    %155 = vmatpush1.msra.mxu0 0.0
    %156 = vmatprep.subr.mxu0 0.0
    %157 = vmatpush1.msra.mxu0 %v48
    %158 = vmatprep.subr.mxu0 0.0
    %159 = vmatpush1.msra.mxu0 %v47
    %160 = vmatprep.subr.mxu0 0.0
    %161 = vmatpush2.msra.mxu0 0.0
    %162 = vmatprep.subr.mxu0 0.0
    %163 = vmatpush2.msra.mxu0 0.0
    %164 = vmatprep.subr.mxu0 0.0
    %165 = vmatpush2.msra.mxu0 0.0
    %166 = vmatprep.subr.mxu0 0.0
    %167 = vmatpush2.msra.mxu0 0.0
    %168 = vmatprep.subr.mxu0 0.0
    %169 = vmatpush2.msra.mxu0 0.0
    %170 = vmatprep.subr.mxu0 0.0
    %171 = vmatpush2.msra.mxu0 0.0
    %172 = vmatprep.subr.mxu0 0.0
    %173 = vmatpush2.msra.mxu0 0.0
    %174 = vmatprep.subr.mxu0 0.0
    %175 = vmatpush2.msra.mxu0 0.0
    %176 = vmatprep.subr.mxu0 0.0
    %177 = vmatpush2.msra.mxu0 0.0
    %178 = vmatprep.subr.mxu0 0.0
    %179 = vmatpush2.msra.mxu0 0.0
    %180 = vmatprep.subr.mxu0 0.0
    %181 = vmatpush2.msra.mxu0 0.0
    %182 = vmatprep.subr.mxu0 0.0
    %183 = vmatpush2.msra.mxu0 0.0
    %184 = vmatprep.subr.mxu0 0.0
    %185 = vmatpush2.msra.mxu0 0.0
    %186 = vmatprep.subr.mxu0 0.0
    %187 = vmatpush2.msra.mxu0 0.0
    %188 = vmatprep.subr.mxu0 0.0
    %189 = vmatpush2.msra.mxu0 0.0
    %190 = vmatprep.subr.mxu0 0.0
    %191 = vmatpush2.msra.mxu0 0.0
    %192 = vmatprep.mubr.f32.mxu0 0.0
    %193 = vmatmul.mubr.f32.gmra.mxu0 %v126
    %v194 = vpop.f32.mrf.mxu0
    %v195 = vadd.f32 %v121, %v194
    %v196 = vpop.f32.mrf.mxu0
    %197 = vdwg.mxu0
    %v198 = vld [vmem:[%s4] sm:$0x1]
    %v199 = vlaneseq
    %v200 = vshrl.u32 %v199, 7
    %v201 = vsub.s32 0, %v200
    %v202 = vrot.slane %v198, %v201
    %v203 = vadd.f32 %v195, %v202
    %v204 = vmax.f32 %v203, 0.0
    %v205 = vld [vmem:[%s4 + $0x1] sm:$0x1]
    %v206 = vld [vmem:[%s4 + $0x2] sm:$0x1]
    %vm207 = vcmask 261120
    %v208 = vsel %vm207, %v204, 0.0
    %209 = vadd.xlane.f32.xlu0 %v208
    %v210 = vpop.xlane.xlu0 %209
    %v211 = vrcp.pop 32.0
    %v212 = vmul.f32 %v210, %v211
    %v213 = vsub.f32 %v204, %v212
    %v214 = vmul.f32 %v213, %v213
    %v215 = vsel %vm207, %v214, 0.0
    %216 = vadd.xlane.f32.xlu0 %v215
    %v217 = vpop.xlane.xlu0 %216
    %v218 = vmul.f32 %v217, %v211
    %v219 = vadd.f32 %v218, 1e-05
    %v220 = vrsqrt.pop %v219
    %v221 = vmul.f32 %v213, %v220
    %v222 = vlaneseq
    %v223 = vshrl.u32 %v222, 7
    %v224 = vsub.s32 0, %v223
    %v225 = vrot.slane %v205, %v224
    %v226 = vmul.f32 %v221, %v225
    %v227 = vlaneseq
    %v228 = vshrl.u32 %v227, 7
    %v229 = vsub.s32 0, %v228
    %v230 = vrot.slane %v206, %v229
    %v231 = vadd.f32 %v226, %v230
    %v232 = vld [vmem:[%s5] sm:$0xff]
    %v233 = vld [vmem:[%s5 + $0x8] sm:$0xff]
    %v234 = vld [vmem:[%s5 + $0x10] sm:$0xff]
    %v235 = vld [vmem:[%s5 + $0x18] sm:$0xff]
    %v236 = vld [vmem:[%s6] sm:$0x1]
    %v237 = vlaneseq
    %v238 = vshrl.u32 %v237, 7
    %v239 = vsub.s32 0, %v238
    %v240 = vrot.slane %v236, %v239
    %v242 = vsel %vm207, %v231, 0
    %244 = vmatprep.subr.mxu0 0.0
    %245 = vmatpush1.msra.mxu0 0.0
    %246 = vmatprep.subr.mxu0 0.0
    %247 = vmatpush1.msra.mxu0 0.0
    %248 = vmatprep.subr.mxu0 0.0
    %249 = vmatpush1.msra.mxu0 0.0
    %250 = vmatprep.subr.mxu0 0.0
    %251 = vmatpush1.msra.mxu0 0.0
    %252 = vmatprep.subr.mxu0 0.0
    %253 = vmatpush1.msra.mxu0 0.0
    %254 = vmatprep.subr.mxu0 0.0
    %255 = vmatpush1.msra.mxu0 0.0
    %256 = vmatprep.subr.mxu0 0.0
    %257 = vmatpush1.msra.mxu0 0.0
    %258 = vmatprep.subr.mxu0 0.0
    %259 = vmatpush1.msra.mxu0 0.0
    %260 = vmatprep.subr.mxu0 0.0
    %261 = vmatpush1.msra.mxu0 0.0
    %262 = vmatprep.subr.mxu0 0.0
    %263 = vmatpush1.msra.mxu0 0.0
    %264 = vmatprep.subr.mxu0 0.0
    %265 = vmatpush1.msra.mxu0 0.0
    %266 = vmatprep.subr.mxu0 0.0
    %267 = vmatpush1.msra.mxu0 0.0
    %268 = vmatprep.subr.mxu0 0.0
    %269 = vmatpush1.msra.mxu0 %v235
    %270 = vmatprep.subr.mxu0 0.0
    %271 = vmatpush1.msra.mxu0 %v234
    %272 = vmatprep.subr.mxu0 0.0
    %273 = vmatpush1.msra.mxu0 %v233
    %274 = vmatprep.subr.mxu0 0.0
    %275 = vmatpush1.msra.mxu0 %v232
    %276 = vmatprep.subr.mxu0 0.0
    %277 = vmatpush2.msra.mxu0 0.0
    %278 = vmatprep.subr.mxu0 0.0
    %279 = vmatpush2.msra.mxu0 0.0
    %280 = vmatprep.subr.mxu0 0.0
    %281 = vmatpush2.msra.mxu0 0.0
    %282 = vmatprep.subr.mxu0 0.0
    %283 = vmatpush2.msra.mxu0 0.0
    %284 = vmatprep.subr.mxu0 0.0
    %285 = vmatpush2.msra.mxu0 0.0
    %286 = vmatprep.subr.mxu0 0.0
    %287 = vmatpush2.msra.mxu0 0.0
    %288 = vmatprep.subr.mxu0 0.0
    %289 = vmatpush2.msra.mxu0 0.0
    %290 = vmatprep.subr.mxu0 0.0
    %291 = vmatpush2.msra.mxu0 0.0
    %292 = vmatprep.subr.mxu0 0.0
    %293 = vmatpush2.msra.mxu0 0.0
    %294 = vmatprep.subr.mxu0 0.0
    %295 = vmatpush2.msra.mxu0 0.0
    %296 = vmatprep.subr.mxu0 0.0
    %297 = vmatpush2.msra.mxu0 0.0
    %298 = vmatprep.subr.mxu0 0.0
    %299 = vmatpush2.msra.mxu0 0.0
    %300 = vmatprep.subr.mxu0 0.0
    %301 = vmatpush2.msra.mxu0 0.0
    %302 = vmatprep.subr.mxu0 0.0
    %303 = vmatpush2.msra.mxu0 0.0
    %304 = vmatprep.subr.mxu0 0.0
    %305 = vmatpush2.msra.mxu0 0.0
    %306 = vmatprep.subr.mxu0 0.0
    %307 = vmatpush2.msra.mxu0 0.0
    %308 = vmatprep.mubr.f32.mxu0 0.0
    %309 = vmatmul.mubr.f32.gmra.mxu0 %v242
    %v310 = vpop.f32.mrf.mxu0
    %v311 = vadd.f32 %v240, %v310
    %v312 = vpop.f32.mrf.mxu0
    %313 = vdwg.mxu0
    %v314 = vmax.f32 %v311, 0.0
    %v315 = vld [vmem:[%s6 + $0x1] sm:$0x1]
    %v316 = vld [vmem:[%s6 + $0x2] sm:$0x1]
    %v317 = vsel %vm124, %v314, 0.0
    %318 = vadd.xlane.f32.xlu0 %v317
    %v319 = vpop.xlane.xlu0 %318
    %v320 = vrcp.pop 16.0
    %v321 = vmul.f32 %v319, %v320
    %v322 = vsub.f32 %v314, %v321
    %v323 = vmul.f32 %v322, %v322
    %v324 = vsel %vm124, %v323, 0.0
    %325 = vadd.xlane.f32.xlu0 %v324
    %v326 = vpop.xlane.xlu0 %325
    %v327 = vmul.f32 %v326, %v320
    %v328 = vadd.f32 %v327, 1e-05
    %v329 = vrsqrt.pop %v328
    %v330 = vmul.f32 %v322, %v329
    %v331 = vlaneseq
    %v332 = vshrl.u32 %v331, 7
    %v333 = vsub.s32 0, %v332
    %v334 = vrot.slane %v315, %v333
    %v335 = vmul.f32 %v330, %v334
    %v336 = vlaneseq
    %v337 = vshrl.u32 %v336, 7
    %v338 = vsub.s32 0, %v337
    %v339 = vrot.slane %v316, %v338
    %v340 = vadd.f32 %v335, %v339
    %v341 = vld [vmem:[%s7] sm:$0xff]
    %v342 = vld [vmem:[%s7 + $0x8] sm:$0xff]
    %v343 = vld [vmem:[%s8] sm:$0x1]
    %v345 = vlaneseq
    %v346 = vshrl.u32 %v345, 7
    %v347 = vsub.s32 0, %v346
    %v348 = vrot.slane %v343, %v347
    %v351 = vsel %vm124, %v340, 0
    %353 = vmatprep.subr.mxu0 0.0
    %354 = vmatpush1.msra.mxu0 0.0
    %355 = vmatprep.subr.mxu0 0.0
    %356 = vmatpush1.msra.mxu0 0.0
    %357 = vmatprep.subr.mxu0 0.0
    %358 = vmatpush1.msra.mxu0 0.0
    %359 = vmatprep.subr.mxu0 0.0
    %360 = vmatpush1.msra.mxu0 0.0
    %361 = vmatprep.subr.mxu0 0.0
    %362 = vmatpush1.msra.mxu0 0.0
    %363 = vmatprep.subr.mxu0 0.0
    %364 = vmatpush1.msra.mxu0 0.0
    %365 = vmatprep.subr.mxu0 0.0
    %366 = vmatpush1.msra.mxu0 0.0
    %367 = vmatprep.subr.mxu0 0.0
    %368 = vmatpush1.msra.mxu0 0.0
    %369 = vmatprep.subr.mxu0 0.0
    %370 = vmatpush1.msra.mxu0 0.0
    %371 = vmatprep.subr.mxu0 0.0
    %372 = vmatpush1.msra.mxu0 0.0
    %373 = vmatprep.subr.mxu0 0.0
    %374 = vmatpush1.msra.mxu0 0.0
    %375 = vmatprep.subr.mxu0 0.0
    %376 = vmatpush1.msra.mxu0 0.0
    %377 = vmatprep.subr.mxu0 0.0
    %378 = vmatpush1.msra.mxu0 0.0
    %379 = vmatprep.subr.mxu0 0.0
    %380 = vmatpush1.msra.mxu0 0.0
    %381 = vmatprep.subr.mxu0 0.0
    %382 = vmatpush1.msra.mxu0 %v342
    %383 = vmatprep.subr.mxu0 0.0
    %384 = vmatpush1.msra.mxu0 %v341
    %385 = vmatprep.subr.mxu0 0.0
    %386 = vmatpush2.msra.mxu0 0.0
    %387 = vmatprep.subr.mxu0 0.0
    %388 = vmatpush2.msra.mxu0 0.0
    %389 = vmatprep.subr.mxu0 0.0
    %390 = vmatpush2.msra.mxu0 0.0
    %391 = vmatprep.subr.mxu0 0.0
    %392 = vmatpush2.msra.mxu0 0.0
    %393 = vmatprep.subr.mxu0 0.0
    %394 = vmatpush2.msra.mxu0 0.0
    %395 = vmatprep.subr.mxu0 0.0
    %396 = vmatpush2.msra.mxu0 0.0
    %397 = vmatprep.subr.mxu0 0.0
    %398 = vmatpush2.msra.mxu0 0.0
    %399 = vmatprep.subr.mxu0 0.0
    %400 = vmatpush2.msra.mxu0 0.0
    %401 = vmatprep.subr.mxu0 0.0
    %402 = vmatpush2.msra.mxu0 0.0
    %403 = vmatprep.subr.mxu0 0.0
    %404 = vmatpush2.msra.mxu0 0.0
    %405 = vmatprep.subr.mxu0 0.0
    %406 = vmatpush2.msra.mxu0 0.0
    %407 = vmatprep.subr.mxu0 0.0
    %408 = vmatpush2.msra.mxu0 0.0
    %409 = vmatprep.subr.mxu0 0.0
    %410 = vmatpush2.msra.mxu0 0.0
    %411 = vmatprep.subr.mxu0 0.0
    %412 = vmatpush2.msra.mxu0 0.0
    %413 = vmatprep.subr.mxu0 0.0
    %414 = vmatpush2.msra.mxu0 0.0
    %415 = vmatprep.subr.mxu0 0.0
    %416 = vmatpush2.msra.mxu0 0.0
    %417 = vmatprep.mubr.f32.mxu0 0.0
    %418 = vmatmul.mubr.f32.gmra.mxu0 %v351
    %v419 = vpop.f32.mrf.mxu0
    %v420 = vadd.f32 %v348, %v419
    %v421 = vpop.f32.mrf.mxu0
    %422 = vdwg.mxu0
    %v423 = vadd.f32 %v420, %v45
    %424 = vst.msk [vmem:[#allocation5] sm:$0xff] %vm124, %v423
    // Predicated region
    $region42: #{tpu_custom_call.1} parent=1 // pred_check
      _
    $region43: #{tpu_custom_call.1} parent=1 // pred_check_branch
      %426 = sbr.rel (0) target = $region45
    $region44: #{tpu_custom_call.1} parent=1 // pred_region
      %s428 = ssub.s32 128, 128
      %429 = vsyncadd [#allocation4], %s428
      %s431 = sshll.u32 [#allocation5], 4
      %s432 = int_to_ptr.vmem [resolvable:$true] %s431
      %434 = dma.vmem_to_hbm [thread:$0]  %s432, 128, %s9, [#allocation4]
    $region45: #{tpu_custom_call.1} parent=1 // pred_fallthru
      _
    // Predicated region
    $region46: #{tpu_custom_call.1} parent=1 // pred_check
      _
    $region47: #{tpu_custom_call.1} parent=1 // pred_check_branch
      %436 = sbr.rel (0) target = $region49
    $region48: #{tpu_custom_call.1} parent=1 // pred_region
      %437 = dma.done [#allocation4], 128
    $region49: #{tpu_custom_call.1} parent=1 // pred_fallthru
      _
    %438 = vsyncpa [#allocation3], 1
    %439 = vsyncpa [#allocation4], 1

</llo_original>
